<compile_context>
chip_gen: v5e
topology: v5e:2x2
jax: 0.10.0
libtpu: 0.0.40
codegen_flags: <defaults>
</compile_context>

<pallas_src>
import functools

import jax
import jax.numpy as jnp
from jax.experimental import pallas as pl
from jax.experimental.pallas import tpu as pltpu


def _material_decoder_kernel(x_ref, w_ref, b_ref, s_ref, o_ref,
                             *, final_activation, apply_scale):
    # x_ref: (TILE_N, D)   w_ref: (D, F_pad)   b_ref/s_ref: (1, F_pad)
    x = x_ref[...]

    # mask = any(x != 0, axis=-1) -> (TILE_N, 1) bool
    mask = jnp.any(x != 0.0, axis=-1, keepdims=True)

    # Linear layer on the MXU (tiny K=D, F_pad lanes; f32 accumulate).
    y = jnp.dot(x, w_ref[...], preferred_element_type=jnp.float32) + b_ref[...]

    if final_activation is None:
        pass
    elif final_activation == "gelu":
        y = jax.nn.gelu(y, approximate=False)   # torch F.gelu default = exact erf gelu
    elif final_activation == "relu":
        y = jnp.maximum(y, 0.0)
    else:
        raise Exception("unknown activation!")

    # scatter-into-zeros equivalent: zero rows whose mask is False.
    y = jnp.where(mask, y, 0.0)

    if apply_scale:
        # scale = rsqrt(sum(W^2, dim=-1)) precomputed in the wrapper (loop-invariant).
        y = y * s_ref[...]

    o_ref[...] = jax.nn.sigmoid(y)


def material_decoder_forward(inputs, weight, bias,
                             final_activation=None,
                             norm_in_element_projection=False,
                             tile_n=2048):
    """inputs: (N, ele_dim) f32, weight: (mat_feat, ele_dim) f32, bias: (mat_feat,) f32."""
    n, d = inputs.shape
    f = weight.shape[0]
    f_pad = ((f + 127) // 128) * 128          # lane-dense output width

    # Glue in plain JAX: transpose + zero-pad feature axis to a multiple of 128.
    w_t = jnp.zeros((d, f_pad), jnp.float32).at[:, :f].set(jnp.transpose(weight))
    b2 = jnp.zeros((1, f_pad), jnp.float32).at[:, :f].set(bias)

    if norm_in_element_projection:
        scale = jax.lax.rsqrt(jnp.sum(weight * weight, axis=-1))    # (F,)
        s2 = jnp.ones((1, f_pad), jnp.float32).at[:, :f].set(scale)
    else:
        s2 = jnp.ones((1, f_pad), jnp.float32)   # unused inside kernel

    # Mask output computed in plain JAX (fused by XLA); no lane-1 kernel output.
    mask = jnp.any(inputs != 0, axis=-1)

    # Pick the row tile (sublane aligned) and zero-pad N so the grid divides evenly.
    tn = min(int(tile_n), max(8, ((n + 7) // 8) * 8))
    n_pad = ((n + tn - 1) // tn) * tn
    x = inputs
    if n_pad != n:
        x = jnp.zeros((n_pad, d), inputs.dtype).at[:n].set(inputs)

    grid = (pl.cdiv(n_pad, tn),)

    cost = pl.CostEstimate(
        flops=2 * n_pad * d * f_pad,
        transcendentals=n_pad * f_pad,                       # sigmoid per output element
        bytes_accessed=(n_pad * d + d * f_pad + n_pad * f_pad + 2 * f_pad) * 4,
    )

    kernel = functools.partial(
        _material_decoder_kernel,
        final_activation=final_activation,
        apply_scale=norm_in_element_projection,
    )

    out = pl.pallas_call(
        kernel,
        grid=grid,
        in_specs=[
            pl.BlockSpec((tn, d), lambda i: (i, 0)),        # streamed row tiles
            pl.BlockSpec((d, f_pad), lambda i: (0, 0)),     # resident weight
            pl.BlockSpec((1, f_pad), lambda i: (0, 0)),     # resident bias
            pl.BlockSpec((1, f_pad), lambda i: (0, 0)),     # resident scale
        ],
        out_specs=pl.BlockSpec((tn, f_pad), lambda i: (i, 0)),
        out_shape=jax.ShapeDtypeStruct((n_pad, f_pad), jnp.float32),
        compiler_params=pltpu.CompilerParams(
            dimension_semantics=("parallel",),              # v7x: shard rows over 2 TCs
            vmem_limit_bytes=32 * 1024 * 1024,              # headroom, fits all chips
        ),
        cost_estimate=cost,
    )(x, w_t, b2, s2)

    # Strip the N and F padding back off (plain-JAX glue).
    return out[:n, :f], mask


def _reference(inputs, weight, bias, final_activation=None, norm=False):
    """Pure-JAX reference of the PyTorch forward."""
    mask = jnp.any(inputs != 0, axis=-1)
    y = inputs @ weight.T + bias
    if final_activation == "gelu":
        y = jax.nn.gelu(y, approximate=False)
    elif final_activation == "relu":
        y = jnp.maximum(y, 0.0)
    y = jnp.where(mask[:, None], y, 0.0)
    if norm:
        y = y * jax.lax.rsqrt(jnp.sum(weight ** 2, axis=-1))
    return jax.nn.sigmoid(y), mask


if __name__ == "__main__":
    ELE_DIM = 32          # ele_dim_features
    MAT_FEAT = 83         # mat_feature_len
    N = 8                 # number of element rows (small test)

    key = jax.random.PRNGKey(0)
    k_x, k_w, k_b, k_x2 = jax.random.split(key, 4)

    # deterministic synthetic parameters (nn.Linear(ele_dim, mat_feature_len) shapes)
    bound = 1.0 / jnp.sqrt(ELE_DIM)
    weight = jax.random.uniform(k_w, (MAT_FEAT, ELE_DIM), jnp.float32, -bound, bound)
    bias = jax.random.uniform(k_b, (MAT_FEAT,), jnp.float32, -bound, bound)

    # inputs, with some all-zero rows so the mask path is exercised
    x = jax.random.normal(k_x, (N, ELE_DIM), jnp.float32)
    x = x.at[2].set(0.0).at[5].set(0.0)

    # --- default flags (no activation, no norm) ---
    out, mask = material_decoder_forward(x, weight, bias)
    out = jax.block_until_ready(out)
    mask = jax.block_until_ready(mask)
    ref_out, ref_mask = _reference(x, weight, bias)
    assert out.shape == (N, MAT_FEAT) and mask.shape == (N,)
    assert bool(jnp.all(mask == ref_mask))
    assert float(jnp.max(jnp.abs(out - ref_out))) < 1e-5

    # --- relu + norm_in_element_projection, multi-tile grid with N padding ---
    N2 = 300
    x2 = jax.random.normal(k_x2, (N2, ELE_DIM), jnp.float32)
    x2 = x2.at[7].set(0.0).at[123].set(0.0)
    out2, mask2 = material_decoder_forward(
        x2, weight, bias,
        final_activation="relu", norm_in_element_projection=True, tile_n=128)
    out2 = jax.block_until_ready(out2)
    ref_out2, ref_mask2 = _reference(x2, weight, bias,
                                     final_activation="relu", norm=True)
    assert out2.shape == (N2, MAT_FEAT) and mask2.shape == (N2,)
    assert bool(jnp.all(mask2 == ref_mask2))
    assert float(jnp.max(jnp.abs(out2 - ref_out2))) < 1e-5

    print("KERNEL_OK")
</pallas_src>

<mosaic_0001>
module attributes {stable_mosaic.version = 11 : i64} {
  func.func @_material_decoder_kernel(%arg0: i32, %arg1: memref<8x32xf32, #tpu.memory_space<vmem>>, %arg2: memref<32x128xf32, #tpu.memory_space<vmem>>, %arg3: memref<1x128xf32, #tpu.memory_space<vmem>>, %arg4: memref<1x128xf32, #tpu.memory_space<vmem>>, %arg5: memref<8x128xf32, #tpu.memory_space<vmem>>) attributes {dimension_semantics = [#tpu.dimension_semantics<parallel>], iteration_bounds = array<i64: 1>, scalar_prefetch = 0 : i64, scratch_operands = 0 : i64, tpu.core_type = #tpu.core_type<tc>, window_params = [{transform_indices = @transform_0, window_bounds = array<i64: 8, 32>}, {pipeline_mode = #tpu.pipeline_mode<synchronous>, transform_indices = @transform_1, window_bounds = array<i64: 32, 128>}, {pipeline_mode = #tpu.pipeline_mode<synchronous>, transform_indices = @transform_2, window_bounds = array<i64: 1, 128>}, {pipeline_mode = #tpu.pipeline_mode<synchronous>, transform_indices = @transform_3, window_bounds = array<i64: 1, 128>}, {transform_indices = @transform_4, window_bounds = array<i64: 8, 128>}]} {
    %c0 = arith.constant 0 : index
    %c0_0 = arith.constant 0 : index
    %0 = vector.load %arg1[%c0, %c0_0] : memref<8x32xf32, #tpu.memory_space<vmem>>, vector<8x32xf32>
    %cst = arith.constant 0.000000e+00 : f32
    %1 = vector.broadcast %cst : f32 to vector<8x32xf32>
    %2 = arith.cmpf one, %0, %1 : vector<8x32xf32>
    %cst_1 = arith.constant 1.000000e+00 : f32
    %cst_2 = arith.constant 0.000000e+00 : f32
    %3 = vector.broadcast %cst_1 : f32 to vector<8x32xf32>
    %4 = vector.broadcast %cst_2 : f32 to vector<8x32xf32>
    %5 = arith.select %2, %3, %4 : vector<8x32xi1>, vector<8x32xf32>
    %cst_3 = arith.constant dense<0xFF800000> : vector<8xf32>
    %6 = vector.multi_reduction <maximumf>, %5, %cst_3 [1] : vector<8x32xf32> to vector<8xf32>
    %cst_4 = arith.constant 0.000000e+00 : f32
    %7 = vector.broadcast %cst_4 : f32 to vector<8xf32>
    %8 = arith.cmpf ogt, %6, %7 : vector<8xf32>
    %9 = vector.shape_cast %8 : vector<8xi1> to vector<8x1xi1>
    %c0_5 = arith.constant 0 : index
    %c0_6 = arith.constant 0 : index
    %10 = vector.load %arg2[%c0_5, %c0_6] : memref<32x128xf32, #tpu.memory_space<vmem>>, vector<32x128xf32>
    %cst_7 = arith.constant dense<0.000000e+00> : vector<8x128xf32>
    %11 = tpu.matmul %0, %10, %cst_7 {dimension_numbers = #tpu.dot_dimension_numbers<[1], [0], [0], [1], [0, 0, 1, 1], [], []>} : vector<8x32xf32>, vector<32x128xf32>, vector<8x128xf32> -> vector<8x128xf32>
    %c0_8 = arith.constant 0 : index
    %c0_9 = arith.constant 0 : index
    %12 = vector.load %arg3[%c0_8, %c0_9] : memref<1x128xf32, #tpu.memory_space<vmem>>, vector<1x128xf32>
    %13 = vector.broadcast %12 : vector<1x128xf32> to vector<8x128xf32>
    %14 = arith.addf %11, %13 : vector<8x128xf32>
    %cst_10 = arith.constant 0.000000e+00 : f32
    %15 = vector.shape_cast %9 : vector<8x1xi1> to vector<8x1xi1>
    %16 = vector.broadcast %15 : vector<8x1xi1> to vector<8x128xi1>
    %17 = vector.broadcast %cst_10 : f32 to vector<8x128xf32>
    %18 = arith.select %16, %14, %17 : vector<8x128xi1>, vector<8x128xf32>
    %19 = arith.negf %18 : vector<8x128xf32>
    %20 = math.exp %19 : vector<8x128xf32>
    %cst_11 = arith.constant 1.000000e+00 : f32
    %21 = vector.broadcast %cst_11 : f32 to vector<8x128xf32>
    %22 = arith.addf %21, %20 : vector<8x128xf32>
    %23 = arith.divf %21, %22 : vector<8x128xf32>
    %c0_12 = arith.constant 0 : index
    %c0_13 = arith.constant 0 : index
    %24 = vector.load %arg5[%c0_12, %c0_13] : memref<8x128xf32, #tpu.memory_space<vmem>>, vector<8x128xf32>
    tpu.vector_store %arg5[%c0_12, %c0_13], %23 {strides = array<i32>} : memref<8x128xf32, #tpu.memory_space<vmem>>, vector<8x128xf32>,
    return
  }
  func.func @transform_0(%arg0: i32) -> (i32, i32) {
    %c0_i32 = arith.constant 0 : i32
    %c0_i32_0 = arith.constant 0 : i32
    return %arg0, %c0_i32 : i32, i32
  }
  func.func @transform_1(%arg0: i32) -> (i32, i32) {
    %c0_i32 = arith.constant 0 : i32
    %c0_i32_0 = arith.constant 0 : i32
    %c0_i32_1 = arith.constant 0 : i32
    return %c0_i32, %c0_i32_0 : i32, i32
  }
  func.func @transform_2(%arg0: i32) -> (i32, i32) {
    %c0_i32 = arith.constant 0 : i32
    %c0_i32_0 = arith.constant 0 : i32
    %c0_i32_1 = arith.constant 0 : i32
    return %c0_i32, %c0_i32_0 : i32, i32
  }
  func.func @transform_3(%arg0: i32) -> (i32, i32) {
    %c0_i32 = arith.constant 0 : i32
    %c0_i32_0 = arith.constant 0 : i32
    %c0_i32_1 = arith.constant 0 : i32
    return %c0_i32, %c0_i32_0 : i32, i32
  }
  func.func @transform_4(%arg0: i32) -> (i32, i32) {
    %c0_i32 = arith.constant 0 : i32
    %c0_i32_0 = arith.constant 0 : i32
    return %arg0, %c0_i32 : i32, i32
  }
}

</mosaic_0001>

<llo_original>
// kernel: tpu_custom_call.1
$region0: #{tpu_custom_call.1}
  #allocation0 [shape = 'u32[]', space=smem, size = 0x4, offset = 0x4, fixed_abs, tag = 'smem constant byte address 0x4 - core index']
  #allocation1 [shape = 'u32[72,128]{1,0:T(1,128)}', space=vmem, size = 0x9000, scoped, tag = 'internal scratch']
  %s0 = inlined_call_operand.hbm [shape: f32[8,32], index: 0, kind: input, shape index: {}]
  %s1 = inlined_call_operand.hbm [shape: f32[32,128], index: 1, kind: input, shape index: {}]
  %s2 = inlined_call_operand.vmem [shape: f32[1,128], index: 2, kind: input, shape index: {}]
  %s3 = inlined_call_operand.vmem [shape: f32[1,128], index: 3, kind: input, shape index: {}]
  %s4 = inlined_call_operand.hbm [shape: f32[8,128], index: 4, kind: output, shape index: {}]
  %s5 = sld [smem:[#allocation0]]
  $region34: #{tpu_custom_call.1} parent=0
    _
  %s7 = ssub.s32 1, %s5
  %s8 = scalar_select 0, %s7, %s5
  $region1: #{tpu_custom_call.1} parent=0
    #allocation2 [shape = 'u8[4096]{0}', space=vmem, size = 0x1000, scoped, tag = 'input window, operand 0, single buffered']
    #allocation3 [shape = 's32[1]{0}', space=sflag, size = 0x4, scoped, tag = 'scoped memory for tpu_custom_call.1']
    #allocation4 [shape = 's32[1]{0}', space=sflag, size = 0x4, scoped, tag = 'scoped memory for tpu_custom_call.1']
    #allocation5 [shape = 'u8[16384]{0}', space=vmem, size = 0x4000, scoped, tag = 'input window, operand 1, single buffered']
    #allocation6 [shape = 's32[1]{0}', space=sflag, size = 0x4, scoped, tag = 'scoped memory for tpu_custom_call.1']
    #allocation7 [shape = 'u8[4096]{0}', space=vmem, size = 0x1000, scoped, tag = 'output window, operand 0, single buffered']
    %9 = vsyncpa [#allocation3], 0
    %10 = vsyncpa [#allocation6], 0
    %11 = vsyncpa [#allocation4], 0
    // Predicated region
    $region2: #{tpu_custom_call.1} parent=1 // pred_check
      _
    $region3: #{tpu_custom_call.1} parent=1 // pred_check_branch
      %13 = sbr.rel (0) target = $region5
    $region4: #{tpu_custom_call.1} parent=1 // pred_region
      %15 = vsyncadd [#allocation3], 0
      %s17 = sshll.u32 %s0, 4
      %s18 = int_to_ptr.hbm [resolvable:$true] %s17
      %s19 = sshll.u32 [#allocation2], 4
      %s20 = int_to_ptr.vmem [resolvable:$true] %s19
      %22 = dma.hbm_to_vmem [thread:$0]  %s18, 128, %s20, [#allocation3]
    $region5: #{tpu_custom_call.1} parent=1 // pred_fallthru
      _
    // Predicated region
    $region6: #{tpu_custom_call.1} parent=1 // pred_check
      _
    $region7: #{tpu_custom_call.1} parent=1 // pred_check_branch
      %24 = sbr.rel (0) target = $region9
    $region8: #{tpu_custom_call.1} parent=1 // pred_region
      %26 = vsyncadd [#allocation6], 0
      %s27 = sshll.u32 %s1, 4
      %s28 = int_to_ptr.hbm [resolvable:$true] %s27
      %s29 = sshll.u32 [#allocation5], 4
      %s30 = int_to_ptr.vmem [resolvable:$true] %s29
      %35 = dma.hbm_to_vmem [thread:$0]  %s28, 512, %s30, [#allocation6], 128, 128, 8
    $region9: #{tpu_custom_call.1} parent=1 // pred_fallthru
      _
    // Predicated region
    $region10: #{tpu_custom_call.1} parent=1 // pred_check
      _
    $region11: #{tpu_custom_call.1} parent=1 // pred_check_branch
      %37 = sbr.rel (0) target = $region13
    $region12: #{tpu_custom_call.1} parent=1 // pred_region
      _
    $region13: #{tpu_custom_call.1} parent=1 // pred_fallthru
      _
    // Predicated region
    $region14: #{tpu_custom_call.1} parent=1 // pred_check
      _
    $region15: #{tpu_custom_call.1} parent=1 // pred_check_branch
      %39 = sbr.rel (0) target = $region17
    $region16: #{tpu_custom_call.1} parent=1 // pred_region
      _
    $region17: #{tpu_custom_call.1} parent=1 // pred_fallthru
      _
    // Predicated region
    $region18: #{tpu_custom_call.1} parent=1 // pred_check
      _
    $region19: #{tpu_custom_call.1} parent=1 // pred_check_branch
      %41 = sbr.rel (0) target = $region21
    $region20: #{tpu_custom_call.1} parent=1 // pred_region
      %43 = dma.done [#allocation3], 128
    $region21: #{tpu_custom_call.1} parent=1 // pred_fallthru
      _
    // Predicated region
    $region22: #{tpu_custom_call.1} parent=1 // pred_check
      _
    $region23: #{tpu_custom_call.1} parent=1 // pred_check_branch
      %45 = sbr.rel (0) target = $region25
    $region24: #{tpu_custom_call.1} parent=1 // pred_region
      %47 = dma.done [#allocation6], 512
    $region25: #{tpu_custom_call.1} parent=1 // pred_fallthru
      _
    %v48 = vld [vmem:[#allocation2] sm:$0xff]
    %vm49 = vcmp.ne.f32.partialorder %v48, 0.0
    %v50 = vsel %vm49, 1.0, 0.0
    %vm51 = vcmask 261120
    %v52 = vsel %vm51, %v50, -inf
    %53 = vmax.xlane.f32.xlu0 %v52
    %v54 = vpop.xlane.xlu0 %53
    %vm55 = vcmp.gt.f32.partialorder %v54, 0.0
    %v56 = vld [vmem:[#allocation5] sm:$0xff]
    %v57 = vld [vmem:[#allocation5 + $0x8] sm:$0xff]
    %v58 = vld [vmem:[#allocation5 + $0x10] sm:$0xff]
    %v59 = vld [vmem:[#allocation5 + $0x18] sm:$0xff]
    %v60 = vld [vmem:[%s2] sm:$0x1]
    %v62 = vperm.slane %v60, 0
    %v65 = vsel %vm51, %v48, 0
    %67 = vmatpush.msra.mxu0 0.0
    %68 = vmatpush.msra.mxu0 0.0
    %69 = vmatpush.msra.mxu0 0.0
    %70 = vmatpush.msra.mxu0 0.0
    %71 = vmatpush.msra.mxu0 0.0
    %72 = vmatpush.msra.mxu0 0.0
    %73 = vmatpush.msra.mxu0 0.0
    %74 = vmatpush.msra.mxu0 0.0
    %75 = vmatpush.msra.mxu0 0.0
    %76 = vmatpush.msra.mxu0 0.0
    %77 = vmatpush.msra.mxu0 0.0
    %78 = vmatpush.msra.mxu0 0.0
    %79 = vmatpush.msra.mxu0 %v59
    %80 = vmatpush.msra.mxu0 %v58
    %81 = vmatpush.msra.mxu0 %v57
    %82 = vmatpush.msra.mxu0 %v56
    %83 = vmatmul.f32.gmra.mxu0 %v65
    %v84 = vpop.f32.mrf.mxu0
    %v85 = vadd.f32 %v62, %v84
    %86 = vdwg.mxu0
    %v87 = vsel %vm55, 1, 0
    %vm88 = vcmp.eq.s32.totalorder %v87, 1
    %v89 = vsel %vm88, %v85, 0.0
    %v90 = vxor.u32 %v89, 2147483648
    %v91 = vmul.f32 %v90, 1.442695
    %v92 = vpow.pop %v91
    %v93 = vadd.f32 %v92, 1.0
    %v94 = vrcp.pop %v93
    %v95 = vmul.f32 %v93, %v94
    %v96 = vsub.f32 1.0, %v95
    %v97 = vmul.f32 %v94, %v96
    %v98 = vadd.f32 %v94, %v97
    %vm99 = vweird.f32 %v93
    %vm100 = vweird.f32 %v94
    %vm101 = vmor %vm99, %vm100
    %v102 = vsel %vm101, %v94, %v98
    %v103 = vand.u32 2147483647, %v93
    %vm104 = vcmp.eq.f32.partialorder %v103, 8.507059e+37
    %v105 = vand.u32 %v93, 2147483648
    %v106 = vor.u32 1.1754944e-38, %v105
    %v107 = vsel %vm104, %v106, %v102
    %v108 = vmul.f32 1.0, %v107
    %109 = vst [vmem:[#allocation7] sm:$0xff] %v108
    // Predicated region
    $region26: #{tpu_custom_call.1} parent=1 // pred_check
      _
    $region27: #{tpu_custom_call.1} parent=1 // pred_check_branch
      %111 = sbr.rel (0) target = $region29
    $region28: #{tpu_custom_call.1} parent=1 // pred_region
      %113 = vsyncadd [#allocation4], 0
      %s115 = sshll.u32 [#allocation7], 4
      %s116 = int_to_ptr.vmem [resolvable:$true] %s115
      %s117 = sshll.u32 %s4, 4
      %s118 = int_to_ptr.hbm [resolvable:$true] %s117
      %120 = dma.vmem_to_hbm [thread:$0]  %s116, 128, %s118, [#allocation4]
    $region29: #{tpu_custom_call.1} parent=1 // pred_fallthru
      _
    // Predicated region
    $region30: #{tpu_custom_call.1} parent=1 // pred_check
      _
    $region31: #{tpu_custom_call.1} parent=1 // pred_check_branch
      %122 = sbr.rel (0) target = $region33
    $region32: #{tpu_custom_call.1} parent=1 // pred_region
      %124 = dma.done [#allocation4], 128
    $region33: #{tpu_custom_call.1} parent=1 // pred_fallthru
      _
    %125 = vsyncpa [#allocation3], 1
    %126 = vsyncpa [#allocation6], 1
    %127 = vsyncpa [#allocation4], 1

</llo_original>
